<compile_context>
chip_gen: v5e
topology: v5e:2x2
jax: 0.10.0
libtpu: 0.0.40
codegen_flags: <defaults>
</compile_context>

<pallas_src>
import jax
import jax.numpy as jnp
from jax.experimental import pallas as pl
from jax.experimental.pallas import tpu as pltpu


def _fc_res_kernel(x_ref, w1_ref, b1_ref, w2_ref, b2_ref, o_ref, acc_ref):
    """Grid = (batch_tiles, hidden_tiles). Axis 1 streams the hidden dim:
    y1_j = relu(x @ W1[:, j] + b1[j]);  acc += y1_j @ W2[j, :]
    finalize: out = x + relu(acc + b2)."""
    j = pl.program_id(1)
    nj = pl.num_programs(1)

    @pl.when(j == 0)
    def _init():
        acc_ref[...] = jnp.zeros_like(acc_ref)

    # Cast the (small) activation tile to the weight dtype so bf16/fp8 weights
    # hit the MXU at native rate; products accumulate in f32.
    x_w = x_ref[...].astype(w1_ref.dtype)
    y1 = jnp.dot(x_w, w1_ref[...], preferred_element_type=jnp.float32)
    y1 = jnp.maximum(y1 + b1_ref[...].astype(jnp.float32), 0.0)
    acc_ref[...] += jnp.dot(y1.astype(w2_ref.dtype), w2_ref[...],
                            preferred_element_type=jnp.float32)

    @pl.when(j == nj - 1)
    def _finalize():
        y2 = jnp.maximum(acc_ref[...] + b2_ref[...].astype(jnp.float32), 0.0)
        # Re-read x from VMEM here instead of holding it in vregs across both
        # matmul passes (avoids spills, esp. on v5e's single vector-store slot).
        o_ref[...] = (x_ref[...].astype(jnp.float32) + y2).astype(o_ref.dtype)


def _round_up(x, m):
    return ((x + m - 1) // m) * m


def _vmem_capacity_bytes():
    try:
        cap = getattr(pltpu.get_tpu_info(), "vmem_capacity_bytes", None)
        if cap:
            return int(cap)
    except Exception:
        pass
    return 64 << 20  # conservative default (v7x per-TensorCore VMEM)


def _choose_tiles(B, D, x_dtype, w_dtype, requested_tb, vmem_budget):
    """Pick (tb, tj): batch-tile rows and hidden-dim tile width.

    tj = D whenever the double-buffered weight blocks fit a weight budget;
    otherwise the hidden dim is streamed in 128-multiple chunks (requires
    D % 128 == 0). tb then fills the remaining VMEM, sublane-aligned, capped
    so the batch grid keeps >= 2 steps (v7x megacore)."""
    xb = jnp.dtype(x_dtype).itemsize
    wb = jnp.dtype(w_dtype).itemsize
    row_mult = 8 * max(1, 4 // xb)          # f32: 8, bf16: 16, int8/fp8: 32

    weight_budget = max(4 << 20, vmem_budget // 3)
    tj = D
    if D % 128 == 0:
        while tj > 128 and 4 * D * tj * wb > weight_budget:
            cand = tj // 2
            if cand % 128 != 0 or D % cand != 0:
                break
            tj = cand
    # TODO(synk): if D is not a multiple of 128 AND the full DxD weights exceed
    # the weight budget (very large, oddly-shaped D), pad D instead of failing.

    weight_vmem = 4 * D * tj * wb + 2 * (tj + D) * wb          # W1,W2 blocks + biases (2-buf)
    stream_per_row = 4 * D * xb + 4 * D + 4 * tj               # x+out (2-buf) + f32 acc + y1
    avail = max(vmem_budget - weight_vmem, stream_per_row * row_mult)
    tb_cap = max(row_mult, (avail // stream_per_row) // row_mult * row_mult)
    tb = max(row_mult, min(_round_up(requested_tb, row_mult), tb_cap))

    if _round_up(B, row_mult) >= 2 * row_mult:                 # keep >= 2 batch steps
        tb = min(tb, _round_up(pl.cdiv(B, 2), row_mult))
    return tb, tj


def fc_res_layer(x, w1_t, b1, w2_t, b2, *, block_b=2048):
    """x: [B, D]; w*_t: [D, D] (already transposed, kernel computes x @ w*_t); b*: [D]."""
    B, D = x.shape
    assert w1_t.shape == (D, D) and w2_t.shape == (D, D)
    assert b1.shape == (D,) and b2.shape == (D,)

    vmem_cap = _vmem_capacity_bytes()
    vmem_budget = vmem_cap - max(16 << 20, vmem_cap // 4)      # ~48 MiB on v7x, ~96 MiB on 128 MiB parts
    tb, tj = _choose_tiles(B, D, x.dtype, w1_t.dtype, block_b, vmem_budget)

    B_pad = _round_up(B, tb)
    x_p = x if B_pad == B else jnp.pad(x, ((0, B_pad - B), (0, 0)))
    nb = B_pad // tb
    nj = D // tj if (tj < D) else 1
    grid = (nb, nj)

    b1_row = b1.reshape(1, D)
    b2_row = b2.reshape(1, D)

    xb = x.dtype.itemsize
    wb = w1_t.dtype.itemsize
    bb = b1.dtype.itemsize
    vmem_need = (4 * tb * D * xb                     # x + out tiles, double-buffered
                 + 4 * D * tj * wb                   # W1 / W2 blocks, double-buffered
                 + 2 * (tj + D) * bb                 # bias blocks
                 + tb * D * 4                        # f32 accumulator scratch
                 + tb * tj * 4)                      # f32 intermediate y1
    vmem_limit = int(min(max(vmem_need + (8 << 20), 32 << 20), vmem_budget))
    vmem_limit = max(vmem_limit, vmem_need)

    cost = pl.CostEstimate(
        flops=4 * B_pad * D * D,                                       # two DxD matmuls per row
        transcendentals=0,
        bytes_accessed=(2 * B_pad * D * xb                             # x in + out
                        + nb * (2 * D * D * wb + 2 * D * bb)),         # weights/biases per batch tile
    )

    # TODO(synk): optional fp8 weight path on v7x for very large D (halves weight
    # DMA / VMEM); irrelevant at D=128.
    out_p = pl.pallas_call(
        _fc_res_kernel,
        out_shape=jax.ShapeDtypeStruct((B_pad, D), x.dtype),
        grid_spec=pltpu.PrefetchScalarGridSpec(
            num_scalar_prefetch=0,
            grid=grid,
            in_specs=[
                pl.BlockSpec((tb, D), lambda i, j: (i, 0)),    # x tile (constant over j)
                pl.BlockSpec((D, tj), lambda i, j: (0, j)),    # W1^T column block
                pl.BlockSpec((1, tj), lambda i, j: (0, j)),    # b1 block
                pl.BlockSpec((tj, D), lambda i, j: (j, 0)),    # W2^T row block
                pl.BlockSpec((1, D), lambda i, j: (0, 0)),     # b2 (full row)
            ],
            out_specs=pl.BlockSpec((tb, D), lambda i, j: (i, 0)),
            scratch_shapes=[pltpu.VMEM((tb, D), jnp.float32)],
        ),
        compiler_params=pltpu.CompilerParams(
            dimension_semantics=("parallel", "arbitrary"),
            vmem_limit_bytes=vmem_limit,
        ),
        cost_estimate=cost,
    )(x_p, w1_t, b1_row, w2_t, b2_row)

    return out_p[:B] if B_pad != B else out_p


def fc_res_layer_ref(x, w1_t, b1, w2_t, b2):
    """Pure-JAX reference mirroring the kernel's precision choices."""
    xf = x.astype(jnp.float32)
    y = jnp.dot(x.astype(w1_t.dtype), w1_t, preferred_element_type=jnp.float32)
    y = jnp.maximum(y + b1.astype(jnp.float32), 0.0)
    y = jnp.dot(y.astype(w2_t.dtype), w2_t, preferred_element_type=jnp.float32)
    y = jnp.maximum(y + b2.astype(jnp.float32), 0.0)
    return (xf + y).astype(x.dtype)


if __name__ == "__main__":
    D = 128   # linear_size of FCResLayer
    B = 100   # small batch; deliberately NOT a multiple of the tile size

    key = jax.random.PRNGKey(0)
    kx, kw1, kb1, kw2, kb2 = jax.random.split(key, 5)

    # Deterministic init (mimicking nn.Linear's uniform(-1/sqrt(d), 1/sqrt(d)))
    bound = 1.0 / (D ** 0.5)
    x = jax.random.normal(kx, (B, D), dtype=jnp.float32)
    w1 = jax.random.uniform(kw1, (D, D), minval=-bound, maxval=bound, dtype=jnp.float32)
    b1 = jax.random.uniform(kb1, (D,), minval=-bound, maxval=bound, dtype=jnp.float32)
    w2 = jax.random.uniform(kw2, (D, D), minval=-bound, maxval=bound, dtype=jnp.float32)
    b2 = jax.random.uniform(kb2, (D,), minval=-bound, maxval=bound, dtype=jnp.float32)

    # PyTorch Linear computes x @ weight.T + b; hand the kernel weight.T.
    w1_t, w2_t = w1.T, w2.T

    # --- full f32 path (tight tolerance) ---
    out = fc_res_layer(x, w1_t, b1, w2_t, b2)
    jax.block_until_ready(out)
    ref = fc_res_layer_ref(x, w1_t, b1, w2_t, b2)
    assert out.shape == (B, D)
    assert jnp.allclose(out, ref, atol=1e-5, rtol=1e-5), "f32 mismatch vs reference"

    # --- bf16 activations + bf16 weights (v6e/v7x production config) ---
    xb16 = x.astype(jnp.bfloat16)
    w1b, b1b = w1_t.astype(jnp.bfloat16), b1.astype(jnp.bfloat16)
    w2b, b2b = w2_t.astype(jnp.bfloat16), b2.astype(jnp.bfloat16)
    out_b = fc_res_layer(xb16, w1b, b1b, w2b, b2b)
    jax.block_until_ready(out_b)
    ref_b = fc_res_layer_ref(xb16, w1b, b1b, w2b, b2b)
    assert out_b.shape == (B, D) and out_b.dtype == jnp.bfloat16
    assert jnp.allclose(out_b.astype(jnp.float32), ref_b.astype(jnp.float32),
                        atol=3e-2, rtol=3e-2), "bf16 mismatch vs reference"

    print("KERNEL_OK")
</pallas_src>

<mosaic_0001>
module attributes {stable_mosaic.version = 11 : i64} {
  func.func @_fc_res_kernel(%arg0: i32, %arg1: i32, %arg2: memref<56x128xf32, #tpu.memory_space<vmem>>, %arg3: memref<128x128xf32, #tpu.memory_space<vmem>>, %arg4: memref<1x128xf32, #tpu.memory_space<vmem>>, %arg5: memref<128x128xf32, #tpu.memory_space<vmem>>, %arg6: memref<1x128xf32, #tpu.memory_space<vmem>>, %arg7: memref<56x128xf32, #tpu.memory_space<vmem>>, %arg8: memref<56x128xf32, #tpu.memory_space<vmem>>) attributes {dimension_semantics = [#tpu.dimension_semantics<parallel>, #tpu.dimension_semantics<arbitrary>], iteration_bounds = array<i64: 2, 1>, scalar_prefetch = 0 : i64, scratch_operands = 1 : i64, tpu.core_type = #tpu.core_type<tc>, window_params = [{transform_indices = @transform_0, window_bounds = array<i64: 56, 128>}, {transform_indices = @transform_1, window_bounds = array<i64: 128, 128>}, {transform_indices = @transform_2, window_bounds = array<i64: 1, 128>}, {transform_indices = @transform_3, window_bounds = array<i64: 128, 128>}, {pipeline_mode = #tpu.pipeline_mode<synchronous>, transform_indices = @transform_4, window_bounds = array<i64: 1, 128>}, {transform_indices = @transform_5, window_bounds = array<i64: 56, 128>}]} {
    %c0_i32 = arith.constant 0 : i32
    %0 = arith.cmpi eq, %arg1, %c0_i32 : i32
    %1 = arith.extui %0 : i1 to i32
    %c0_i32_0 = arith.constant 0 : i32
    %2 = arith.cmpi ne, %1, %c0_i32_0 : i32
    scf.if %2 {
      %cst_16 = arith.constant 0.000000e+00 : f32
      %19 = vector.broadcast %cst_16 : f32 to vector<56x128xf32>
      %c0_17 = arith.constant 0 : index
      %c0_18 = arith.constant 0 : index
      %20 = vector.load %arg8[%c0_17, %c0_18] : memref<56x128xf32, #tpu.memory_space<vmem>>, vector<56x128xf32>
      tpu.vector_store %arg8[%c0_17, %c0_18], %19 {strides = array<i32>} : memref<56x128xf32, #tpu.memory_space<vmem>>, vector<56x128xf32>,
    } else {
    }
    %c0 = arith.constant 0 : index
    %c0_1 = arith.constant 0 : index
    %3 = vector.load %arg2[%c0, %c0_1] : memref<56x128xf32, #tpu.memory_space<vmem>>, vector<56x128xf32>
    %c0_2 = arith.constant 0 : index
    %c0_3 = arith.constant 0 : index
    %4 = vector.load %arg3[%c0_2, %c0_3] : memref<128x128xf32, #tpu.memory_space<vmem>>, vector<128x128xf32>
    %cst = arith.constant dense<0.000000e+00> : vector<56x128xf32>
    %5 = tpu.matmul %3, %4, %cst {dimension_numbers = #tpu.dot_dimension_numbers<[1], [0], [0], [1], [0, 0, 1, 1], [], []>} : vector<56x128xf32>, vector<128x128xf32>, vector<56x128xf32> -> vector<56x128xf32>
    %c0_4 = arith.constant 0 : index
    %c0_5 = arith.constant 0 : index
    %6 = vector.load %arg4[%c0_4, %c0_5] : memref<1x128xf32, #tpu.memory_space<vmem>>, vector<1x128xf32>
    %7 = vector.broadcast %6 : vector<1x128xf32> to vector<56x128xf32>
    %8 = arith.addf %5, %7 : vector<56x128xf32>
    %cst_6 = arith.constant 0.000000e+00 : f32
    %9 = vector.broadcast %cst_6 : f32 to vector<56x128xf32>
    %10 = arith.maximumf %8, %9 : vector<56x128xf32>
    %c0_7 = arith.constant 0 : index
    %c0_8 = arith.constant 0 : index
    %11 = vector.load %arg8[%c0_7, %c0_8] : memref<56x128xf32, #tpu.memory_space<vmem>>, vector<56x128xf32>
    %c0_9 = arith.constant 0 : index
    %c0_10 = arith.constant 0 : index
    %12 = vector.load %arg5[%c0_9, %c0_10] : memref<128x128xf32, #tpu.memory_space<vmem>>, vector<128x128xf32>
    %cst_11 = arith.constant dense<0.000000e+00> : vector<56x128xf32>
    %13 = tpu.matmul %10, %12, %cst_11 {dimension_numbers = #tpu.dot_dimension_numbers<[1], [0], [0], [1], [0, 0, 1, 1], [], []>} : vector<56x128xf32>, vector<128x128xf32>, vector<56x128xf32> -> vector<56x128xf32>
    %14 = arith.addf %11, %13 : vector<56x128xf32>
    %c0_12 = arith.constant 0 : index
    %c0_13 = arith.constant 0 : index
    %15 = vector.load %arg8[%c0_12, %c0_13] : memref<56x128xf32, #tpu.memory_space<vmem>>, vector<56x128xf32>
    tpu.vector_store %arg8[%c0_12, %c0_13], %14 {strides = array<i32>} : memref<56x128xf32, #tpu.memory_space<vmem>>, vector<56x128xf32>,
    %c0_i32_14 = arith.constant 0 : i32
    %16 = arith.cmpi eq, %arg1, %c0_i32_14 : i32
    %17 = arith.extui %16 : i1 to i32
    %c0_i32_15 = arith.constant 0 : i32
    %18 = arith.cmpi ne, %17, %c0_i32_15 : i32
    scf.if %18 {
      %c0_16 = arith.constant 0 : index
      %c0_17 = arith.constant 0 : index
      %19 = vector.load %arg8[%c0_16, %c0_17] : memref<56x128xf32, #tpu.memory_space<vmem>>, vector<56x128xf32>
      %c0_18 = arith.constant 0 : index
      %c0_19 = arith.constant 0 : index
      %20 = vector.load %arg6[%c0_18, %c0_19] : memref<1x128xf32, #tpu.memory_space<vmem>>, vector<1x128xf32>
      %21 = vector.broadcast %20 : vector<1x128xf32> to vector<56x128xf32>
      %22 = arith.addf %19, %21 : vector<56x128xf32>
      %cst_20 = arith.constant 0.000000e+00 : f32
      %23 = vector.broadcast %cst_20 : f32 to vector<56x128xf32>
      %24 = arith.maximumf %22, %23 : vector<56x128xf32>
      %c0_21 = arith.constant 0 : index
      %c0_22 = arith.constant 0 : index
      %25 = vector.load %arg2[%c0_21, %c0_22] : memref<56x128xf32, #tpu.memory_space<vmem>>, vector<56x128xf32>
      %26 = arith.addf %25, %24 : vector<56x128xf32>
      %c0_23 = arith.constant 0 : index
      %c0_24 = arith.constant 0 : index
      %27 = vector.load %arg7[%c0_23, %c0_24] : memref<56x128xf32, #tpu.memory_space<vmem>>, vector<56x128xf32>
      tpu.vector_store %arg7[%c0_23, %c0_24], %26 {strides = array<i32>} : memref<56x128xf32, #tpu.memory_space<vmem>>, vector<56x128xf32>,
    } else {
    }
    return
  }
  func.func @transform_0(%arg0: i32, %arg1: i32) -> (i32, i32) {
    %c0_i32 = arith.constant 0 : i32
    %c0_i32_0 = arith.constant 0 : i32
    return %arg0, %c0_i32 : i32, i32
  }
  func.func @transform_1(%arg0: i32, %arg1: i32) -> (i32, i32) {
    %c0_i32 = arith.constant 0 : i32
    %c0_i32_0 = arith.constant 0 : i32
    return %c0_i32, %arg1 : i32, i32
  }
  func.func @transform_2(%arg0: i32, %arg1: i32) -> (i32, i32) {
    %c0_i32 = arith.constant 0 : i32
    %c0_i32_0 = arith.constant 0 : i32
    return %c0_i32, %arg1 : i32, i32
  }
  func.func @transform_3(%arg0: i32, %arg1: i32) -> (i32, i32) {
    %c0_i32 = arith.constant 0 : i32
    %c0_i32_0 = arith.constant 0 : i32
    return %arg1, %c0_i32 : i32, i32
  }
  func.func @transform_4(%arg0: i32, %arg1: i32) -> (i32, i32) {
    %c0_i32 = arith.constant 0 : i32
    %c0_i32_0 = arith.constant 0 : i32
    %c0_i32_1 = arith.constant 0 : i32
    return %c0_i32, %c0_i32_0 : i32, i32
  }
  func.func @transform_5(%arg0: i32, %arg1: i32) -> (i32, i32) {
    %c0_i32 = arith.constant 0 : i32
    %c0_i32_0 = arith.constant 0 : i32
    return %arg0, %c0_i32 : i32, i32
  }
}

</mosaic_0001>

<llo_original>
// kernel: tpu_custom_call.1
$region0: #{tpu_custom_call.1}
  #allocation0 [shape = 'u32[]', space=smem, size = 0x4, offset = 0x4, fixed_abs, tag = 'smem constant byte address 0x4 - core index']
  #allocation1 [shape = 'u32[72,128]{1,0:T(1,128)}', space=vmem, size = 0x9000, scoped, tag = 'internal scratch']
  #allocation2 [shape = 'f32[56,128]{1,0:T(8,128)}', space=vmem, size = 0x7000, scoped, tag = 'scratch operand']
  %s0 = inlined_call_operand.hbm [shape: f32[112,128], index: 0, kind: input, shape index: {}]
  %s1 = inlined_call_operand.hbm [shape: f32[128,128], index: 1, kind: input, shape index: {}]
  %s2 = inlined_call_operand.vmem [shape: f32[1,128], index: 2, kind: input, shape index: {}]
  %s3 = inlined_call_operand.hbm [shape: f32[128,128], index: 3, kind: input, shape index: {}]
  %s4 = inlined_call_operand.vmem [shape: f32[1,128], index: 4, kind: input, shape index: {}]
  %s5 = inlined_call_operand.hbm [shape: f32[112,128], index: 5, kind: output, shape index: {}]
  %s6 = sld [smem:[#allocation0]]
  $region73: #{tpu_custom_call.1} parent=0
    _
  %s8 = ssub.s32 1, %s6
  %s9 = scalar_select 0, %s8, %s6
  $region1: #{tpu_custom_call.1} parent=0
    #allocation3 [shape = 'u8[57344]{0}', space=vmem, size = 0xe000, scoped, tag = 'input window, operand 0']
    #allocation4 [shape = 's32[2]{0}', space=sflag, size = 0x8, scoped, tag = 'scoped memory for tpu_custom_call.1']
    #allocation5 [shape = 's32[2]{0}', space=sflag, size = 0x8, scoped, tag = 'scoped memory for tpu_custom_call.1']
    #allocation6 [shape = 'u8[65536]{0}', space=vmem, size = 0x10000, scoped, tag = 'input window, operand 1, single buffered']
    #allocation7 [shape = 's32[1]{0}', space=sflag, size = 0x4, scoped, tag = 'scoped memory for tpu_custom_call.1']
    #allocation8 [shape = 'u8[65536]{0}', space=vmem, size = 0x10000, scoped, tag = 'input window, operand 3, single buffered']
    #allocation9 [shape = 'u8[57344]{0}', space=vmem, size = 0xe000, scoped, tag = 'output window, operand 0']
    %10 = vsyncpa [#allocation4], 0
    %s11 = scalar_lea.sflag [#allocation4], 1
    %12 = vsyncpa %s11, 0
    %13 = vsyncpa [#allocation7], 0
    %14 = vsyncpa [#allocation5], 0
    %s15 = scalar_lea.sflag [#allocation5], 1
    %16 = vsyncpa %s15, 0
    loop: start=0, step=1, limit=4
    $region2: #{tpu_custom_call.1} parent=1 // loop_pre_header
      _
    $region3: #{tpu_custom_call.1} parent=1 // loop_header
      %s18 = sphi 0, %s22
      %p19 = scmp.ge.s32.totalorder %s18, 4
      %s25 = sphi 0, %s37
      %s26 = sphi 0, %s33
      %s27 = sphi 0, %s25
      %s28 = sphi 0, %s26
      %s29 = sphi 0, %s27
      %s30 = sphi 0, %s28
      %s40 = sphi 0, %s42
      %s43 = sphi 0, %s40
      %s44 = sphi 0, %s43
      %s60 = sphi 0, %s44
      %s66 = sphi 0, %s68
      %s69 = sphi 0, %s66
      %s70 = sphi 0, %s69
      %s86 = sphi 0, %s70
      %s92 = sphi 0, %s94
      %s95 = sphi 0, %s92
      %s96 = sphi 0, %s95
      %s112 = sphi 0, %s96
      %s118 = sphi 0, %s120
      %s121 = sphi 0, %s118
      %s122 = sphi 0, %s121
      %s138 = sphi 0, %s122
      %s142 = sphi 0, %s142
      %s144 = sphi 0, %s142
      %s145 = sphi 0, %s144
      %s159 = sphi 0, %s145
      %s165 = sphi 0, %s167
      %s168 = sphi 0, %s165
      %s169 = sphi 0, %s168
      %s185 = sphi 0, %s169
    $region4: #{tpu_custom_call.1} parent=1 // loop_header_branch
      %21 = sbr.rel (%p19) target = $region8
    $region5: #{tpu_custom_call.1} parent=1 // loop_body
      %s23 = ssub.s32 %s18, 1
      %s24 = ssub.s32 %s18, 2
      %s31 = sadd.s32 1, %s26
      %p32 = scmp.ge.s32.totalorder %s31, 1
      %s33 = scalar_select %p32, 0, %s31
      %s34 = sadd.s32 1, %s25
      %s35 = scalar_select %p32, %s34, %s25
      %p36 = scmp.ge.s32.totalorder %s35, 2
      %s37 = scalar_select %p36, 0, %s35
      %s38 = ssub.s32 %s25, %s37
      %p39 = scmp.eq.s32.totalorder %s38, 0
      %s41 = sadd.s32 %s40, 1
      %s42 = scalar_select %p39, %s40, %s41
      %p45 = pneg %p39
      %p46 = scmp.eq.s32.totalorder %s18, 1
      %p47 = por %p45, %p46
      %p48 = scmp.ne.s32.totalorder %s40, %s43
      %p49 = scmp.eq.s32.totalorder %s18, 0
      %p50 = por %p48, %p49
      %p51 = scmp.ne.s32.totalorder %s40, %s43
      %p52 = scmp.eq.s32.totalorder %s23, 1
      %p53 = por %p51, %p52
      %p54 = scmp.ne.s32.totalorder %s43, %s44
      %p55 = scmp.eq.s32.totalorder %s23, 0
      %p56 = por %p54, %p55
      %p57 = scmp.ne.s32.totalorder %s43, %s44
      %p58 = scmp.eq.s32.totalorder %s24, 1
      %p59 = por %p57, %p58
      %p61 = scmp.ne.s32.totalorder %s44, %s60
      %p62 = scmp.eq.s32.totalorder %s24, 0
      %p63 = por %p61, %p62
      %s64 = ssub.s32 %s26, %s33
      %p65 = scmp.eq.s32.totalorder %s64, 0
      %s67 = sadd.s32 %s66, 1
      %s68 = scalar_select %p65, %s66, %s67
      %p71 = pneg %p65
      %p72 = scmp.eq.s32.totalorder %s18, 1
      %p73 = por %p71, %p72
      %p74 = scmp.ne.s32.totalorder %s66, %s69
      %p75 = scmp.eq.s32.totalorder %s18, 0
      %p76 = por %p74, %p75
      %p77 = scmp.ne.s32.totalorder %s66, %s69
      %p78 = scmp.eq.s32.totalorder %s23, 1
      %p79 = por %p77, %p78
      %p80 = scmp.ne.s32.totalorder %s69, %s70
      %p81 = scmp.eq.s32.totalorder %s23, 0
      %p82 = por %p80, %p81
      %p83 = scmp.ne.s32.totalorder %s69, %s70
      %p84 = scmp.eq.s32.totalorder %s24, 1
      %p85 = por %p83, %p84
      %p87 = scmp.ne.s32.totalorder %s70, %s86
      %p88 = scmp.eq.s32.totalorder %s24, 0
      %p89 = por %p87, %p88
      %s90 = ssub.s32 %s26, %s33
      %p91 = scmp.eq.s32.totalorder %s90, 0
      %s93 = sadd.s32 %s92, 1
      %s94 = scalar_select %p91, %s92, %s93
      %p97 = pneg %p91
      %p98 = scmp.eq.s32.totalorder %s18, 1
      %p99 = por %p97, %p98
      %p100 = scmp.ne.s32.totalorder %s92, %s95
      %p101 = scmp.eq.s32.totalorder %s18, 0
      %p102 = por %p100, %p101
      %p103 = scmp.ne.s32.totalorder %s92, %s95
      %p104 = scmp.eq.s32.totalorder %s23, 1
      %p105 = por %p103, %p104
      %p106 = scmp.ne.s32.totalorder %s95, %s96
      %p107 = scmp.eq.s32.totalorder %s23, 0
      %p108 = por %p106, %p107
      %p109 = scmp.ne.s32.totalorder %s95, %s96
      %p110 = scmp.eq.s32.totalorder %s24, 1
      %p111 = por %p109, %p110
      %p113 = scmp.ne.s32.totalorder %s96, %s112
      %p114 = scmp.eq.s32.totalorder %s24, 0
      %p115 = por %p113, %p114
      %s116 = ssub.s32 %s26, %s33
      %p117 = scmp.eq.s32.totalorder %s116, 0
      %s119 = sadd.s32 %s118, 1
      %s120 = scalar_select %p117, %s118, %s119
      %p123 = pneg %p117
      %p124 = scmp.eq.s32.totalorder %s18, 1
      %p125 = por %p123, %p124
      %p126 = scmp.ne.s32.totalorder %s118, %s121
      %p127 = scmp.eq.s32.totalorder %s18, 0
      %p128 = por %p126, %p127
      %p129 = scmp.ne.s32.totalorder %s118, %s121
      %p130 = scmp.eq.s32.totalorder %s23, 1
      %p131 = por %p129, %p130
      %p132 = scmp.ne.s32.totalorder %s121, %s122
      %p133 = scmp.eq.s32.totalorder %s23, 0
      %p134 = por %p132, %p133
      %p135 = scmp.ne.s32.totalorder %s121, %s122
      %p136 = scmp.eq.s32.totalorder %s24, 1
      %p137 = por %p135, %p136
      %p139 = scmp.ne.s32.totalorder %s122, %s138
      %p140 = scmp.eq.s32.totalorder %s24, 0
      %p141 = por %p139, %p140
      %s143 = sadd.s32 %s142, 1
      %p146 = scmp.eq.s32.totalorder %s18, 1
      %p147 = scmp.ne.s32.totalorder %s142, %s144
      %p148 = scmp.eq.s32.totalorder %s18, 0
      %p149 = por %p147, %p148
      %p150 = scmp.ne.s32.totalorder %s142, %s144
      %p151 = scmp.eq.s32.totalorder %s23, 1
      %p152 = por %p150, %p151
      %p153 = scmp.ne.s32.totalorder %s144, %s145
      %p154 = scmp.eq.s32.totalorder %s23, 0
      %p155 = por %p153, %p154
      %p156 = scmp.ne.s32.totalorder %s144, %s145
      %p157 = scmp.eq.s32.totalorder %s24, 1
      %p158 = por %p156, %p157
      %p160 = scmp.ne.s32.totalorder %s145, %s159
      %p161 = scmp.eq.s32.totalorder %s24, 0
      %p162 = por %p160, %p161
      %s163 = ssub.s32 %s25, %s37
      %p164 = scmp.eq.s32.totalorder %s163, 0
      %s166 = sadd.s32 %s165, 1
      %s167 = scalar_select %p164, %s165, %s166
      %p170 = pneg %p164
      %p171 = scmp.eq.s32.totalorder %s18, 1
      %p172 = por %p170, %p171
      %p173 = scmp.ne.s32.totalorder %s165, %s168
      %p174 = scmp.eq.s32.totalorder %s18, 0
      %p175 = por %p173, %p174
      %p176 = scmp.ne.s32.totalorder %s165, %s168
      %p177 = scmp.eq.s32.totalorder %s23, 1
      %p178 = por %p176, %p177
      %p179 = scmp.ne.s32.totalorder %s168, %s169
      %p180 = scmp.eq.s32.totalorder %s23, 0
      %p181 = por %p179, %p180
      %p182 = scmp.ne.s32.totalorder %s168, %s169
      %p183 = scmp.eq.s32.totalorder %s24, 1
      %p184 = por %p182, %p183
      %p186 = scmp.ne.s32.totalorder %s169, %s185
      %p187 = scmp.eq.s32.totalorder %s24, 0
      %p188 = por %p186, %p187
      %p189 = scmp.le.s32.totalorder 1, %s18
      %p190 = scmp.lt.s32.totalorder %s18, 3
      %p191 = pnand %p189, %p190
      %p192 = pneg %p191
      // Predicated region
      $region9: #{tpu_custom_call.1} parent=5 // pred_check
        _
      $region10: #{tpu_custom_call.1} parent=5 // pred_check_branch
        %194 = sbr.rel (%p191) target = $region12
      $region11: #{tpu_custom_call.1} parent=5 // pred_region
        %s195 = ssub.s32 %s18, 1
        // Predicated region
        $region13: #{tpu_custom_call.1} parent=11 // pred_check
          %p196 = pneg %p82
        $region14: #{tpu_custom_call.1} parent=11 // pred_check_branch
          %198 = sbr.rel (%p196) target = $region16
        $region15: #{tpu_custom_call.1} parent=11 // pred_region
          %200 = vsyncadd [#allocation7], 0
          %s201 = smul.addr %s28, 8
          %s202 = scalar_lea.hbm %s1, %s201
          %s203 = sshll.u32 %s202, 4
          %s204 = int_to_ptr.hbm [resolvable:$true] %s203
          %s205 = sshll.u32 [#allocation6], 4
          %s206 = int_to_ptr.vmem [resolvable:$true] %s205
          %211 = dma.hbm_to_vmem [thread:$0]  %s204, 2048, %s206, [#allocation7], 128, 128, 8
        $region16: #{tpu_custom_call.1} parent=11 // pred_fallthru
          _
        // Predicated region
        $region17: #{tpu_custom_call.1} parent=11 // pred_check
          %p212 = pneg %p108
        $region18: #{tpu_custom_call.1} parent=11 // pred_check_branch
          %214 = sbr.rel (%p212) target = $region20
        $region19: #{tpu_custom_call.1} parent=11 // pred_region
          %p215 = scmp.lt.s32.totalorder %s28, 0
          %s216 = scalar_select %p215, %s28, 0
          %s217 = scalar_lea.vmem %s2, %s216
        $region20: #{tpu_custom_call.1} parent=11 // pred_fallthru
          _
        // Predicated region
        $region21: #{tpu_custom_call.1} parent=11 // pred_check
          %p218 = pneg %p134
        $region22: #{tpu_custom_call.1} parent=11 // pred_check_branch
          %220 = sbr.rel (%p218) target = $region24
        $region23: #{tpu_custom_call.1} parent=11 // pred_region
          %s221 = smul.u32 16, %s28
          %223 = vsyncadd [#allocation7], 0
          %s224 = smul.addr %s221, 8
          %s225 = scalar_lea.hbm %s3, %s224
          %s226 = sshll.u32 %s225, 4
          %s227 = int_to_ptr.hbm [resolvable:$true] %s226
          %s228 = sshll.u32 [#allocation8], 4
          %s229 = int_to_ptr.vmem [resolvable:$true] %s228
          %234 = dma.hbm_to_vmem [thread:$0]  %s227, 2048, %s229, [#allocation7], 128, 128, 8
        $region24: #{tpu_custom_call.1} parent=11 // pred_fallthru
          _
        // Predicated region
        $region25: #{tpu_custom_call.1} parent=11 // pred_check
          %p235 = pneg %p155
        $region26: #{tpu_custom_call.1} parent=11 // pred_check_branch
          %237 = sbr.rel (%p235) target = $region28
        $region27: #{tpu_custom_call.1} parent=11 // pred_region
          _
        $region28: #{tpu_custom_call.1} parent=11 // pred_fallthru
          _
      $region12: #{tpu_custom_call.1} parent=5 // pred_fallthru
        _
      %p238 = scmp.lt.s32.totalorder %s18, 2
      // Predicated region
      $region29: #{tpu_custom_call.1} parent=5 // pred_check
        %p239 = pneg %p238
      $region30: #{tpu_custom_call.1} parent=5 // pred_check_branch
        %241 = sbr.rel (%p239) target = $region32
      $region31: #{tpu_custom_call.1} parent=5 // pred_region
        // Predicated region
        $region33: #{tpu_custom_call.1} parent=31 // pred_check
          %p242 = pneg %p50
        $region34: #{tpu_custom_call.1} parent=31 // pred_check_branch
          %244 = sbr.rel (%p242) target = $region36
        $region35: #{tpu_custom_call.1} parent=31 // pred_region
          %s245 = sand.u32 %s40, 1
          %s246 = scalar_lea.sflag [#allocation4], %s245
          %s247 = sand.u32 %s40, 1
          %s248 = smul.addr %s247, 56
          %s249 = scalar_lea.vmem [#allocation3], %s248
          %s250 = smul.u32 7, %s25
          %252 = vsyncadd %s246, 0
          %s253 = smul.addr %s250, 8
          %s254 = scalar_lea.hbm %s0, %s253
          %s255 = sshll.u32 %s254, 4
          %s256 = int_to_ptr.hbm [resolvable:$true] %s255
          %s257 = sshll.u32 %s249, 4
          %s258 = int_to_ptr.vmem [resolvable:$true] %s257
          %263 = dma.hbm_to_vmem [thread:$0]  %s256, 896, %s258, %s246, 128, 128, 8
        $region36: #{tpu_custom_call.1} parent=31 // pred_fallthru
          _
      $region32: #{tpu_custom_call.1} parent=5 // pred_fallthru
        _
      %p264 = scmp.le.s32.totalorder 1, %s18
      %p265 = scmp.lt.s32.totalorder %s18, 3
      %p266 = pnand %p264, %p265
      %p267 = pneg %p266
      // Predicated region
      $region37: #{tpu_custom_call.1} parent=5 // pred_check
        _
      $region38: #{tpu_custom_call.1} parent=5 // pred_check_branch
        %269 = sbr.rel (%p266) target = $region40
      $region39: #{tpu_custom_call.1} parent=5 // pred_region
        %s270 = ssub.s32 %s18, 1
        %s271 = sand.u32 %s43, 1
        %s272 = scalar_lea.sflag [#allocation4], %s271
        %s273 = sand.u32 %s43, 1
        %s274 = smul.addr %s273, 56
        %s275 = scalar_lea.vmem [#allocation3], %s274
        // Predicated region
        $region41: #{tpu_custom_call.1} parent=39 // pred_check
          %p276 = pneg %p56
        $region42: #{tpu_custom_call.1} parent=39 // pred_check_branch
          %278 = sbr.rel (%p276) target = $region44
        $region43: #{tpu_custom_call.1} parent=39 // pred_region
          %280 = dma.done %s272, 896
        $region44: #{tpu_custom_call.1} parent=39 // pred_fallthru
          _
        // Predicated region
        $region45: #{tpu_custom_call.1} parent=39 // pred_check
          %p281 = pneg %p82
        $region46: #{tpu_custom_call.1} parent=39 // pred_check_branch
          %283 = sbr.rel (%p281) target = $region48
        $region47: #{tpu_custom_call.1} parent=39 // pred_region
          %285 = dma.done [#allocation7], 2048
        $region48: #{tpu_custom_call.1} parent=39 // pred_fallthru
          _
        // Predicated region
        $region49: #{tpu_custom_call.1} parent=39 // pred_check
          %p286 = pneg %p134
        $region50: #{tpu_custom_call.1} parent=39 // pred_check_branch
          %288 = sbr.rel (%p286) target = $region52
        $region51: #{tpu_custom_call.1} parent=39 // pred_region
          %290 = dma.done [#allocation7], 2048
        $region52: #{tpu_custom_call.1} parent=39 // pred_fallthru
          _
        %s291 = sand.u32 %s43, 1
        %s292 = scalar_lea.sflag [#allocation4], %s291
        %s293 = sand.u32 %s43, 1
        %s294 = smul.addr %s293, 56
        %s295 = scalar_lea.vmem [#allocation3], %s294
        %p296 = pneg %p56
        %p297 = pneg %p53
        %p298 = pneg %p82
        %p299 = pneg %p79
        %p300 = scmp.lt.s32.totalorder %s28, 0
        %s301 = scalar_select %p300, %s28, 0
        %s302 = scalar_lea.vmem %s2, %s301
        %p303 = pneg %p108
        %p304 = pneg %p105
        %p305 = pneg %p134
        %p306 = pneg %p131
        %p307 = pneg %p155
        %p308 = pneg %p152
        %p309 = pneg %p181
        %p310 = pneg %p178
        %s311 = sand.u32 %s168, 1
        %s312 = scalar_lea.sflag [#allocation5], %s311
        %s313 = sand.u32 %s168, 1
        %s314 = smul.addr %s313, 56
        %s315 = scalar_lea.vmem [#allocation9], %s314
        %s316 = smul.u32 7, %s27
        %p317 = scmp.lt.s32.totalorder %s28, 0
        %s318 = scalar_select %p317, %s28, 0
        %s319 = scalar_lea.vmem %s2, %s318
        %s320 = smul.u32 16, %s28
        %s321 = smul.u32 7, %s27
        %p322 = scmp.eq.s32.totalorder %s28, 0
        // Predicated region
        $region53: #{tpu_custom_call.1} parent=39 // pred_check
          %p323 = pneg %p322
        $region54: #{tpu_custom_call.1} parent=39 // pred_check_branch
          %325 = sbr.rel (%p323) target = $region56
        $region55: #{tpu_custom_call.1} parent=39 // pred_region
          %326 = vst [vmem:[#allocation2] sm:$0xff] 0.0
          %327 = vst [vmem:[#allocation2 + $0x8] sm:$0xff] 0.0
          %328 = vst [vmem:[#allocation2 + $0x10] sm:$0xff] 0.0
          %329 = vst [vmem:[#allocation2 + $0x18] sm:$0xff] 0.0
          %330 = vst [vmem:[#allocation2 + $0x20] sm:$0xff] 0.0
          %331 = vst [vmem:[#allocation2 + $0x28] sm:$0xff] 0.0
          %332 = vst [vmem:[#allocation2 + $0x30] sm:$0xff] 0.0
        $region56: #{tpu_custom_call.1} parent=39 // pred_fallthru
          _
        %v333 = vld [vmem:[%s275] sm:$0xff]
        %v334 = vld [vmem:[%s275 + $0x8] sm:$0xff]
        %v335 = vld [vmem:[%s275 + $0x10] sm:$0xff]
        %v336 = vld [vmem:[%s275 + $0x18] sm:$0xff]
        %v337 = vld [vmem:[%s275 + $0x20] sm:$0xff]
        %v338 = vld [vmem:[%s275 + $0x28] sm:$0xff]
        %v339 = vld [vmem:[%s275 + $0x30] sm:$0xff]
        %v340 = vld [vmem:[#allocation6] sm:$0xff]
        %v341 = vld [vmem:[#allocation6 + $0x8] sm:$0xff]
        %v342 = vld [vmem:[#allocation6 + $0x10] sm:$0xff]
        %v343 = vld [vmem:[#allocation6 + $0x18] sm:$0xff]
        %v344 = vld [vmem:[#allocation6 + $0x20] sm:$0xff]
        %v345 = vld [vmem:[#allocation6 + $0x28] sm:$0xff]
        %v346 = vld [vmem:[#allocation6 + $0x30] sm:$0xff]
        %v347 = vld [vmem:[#allocation6 + $0x38] sm:$0xff]
        %v348 = vld [vmem:[#allocation6 + $0x40] sm:$0xff]
        %v349 = vld [vmem:[#allocation6 + $0x48] sm:$0xff]
        %v350 = vld [vmem:[#allocation6 + $0x50] sm:$0xff]
        %v351 = vld [vmem:[#allocation6 + $0x58] sm:$0xff]
        %v352 = vld [vmem:[#allocation6 + $0x60] sm:$0xff]
        %v353 = vld [vmem:[#allocation6 + $0x68] sm:$0xff]
        %v354 = vld [vmem:[#allocation6 + $0x70] sm:$0xff]
        %v355 = vld [vmem:[#allocation6 + $0x78] sm:$0xff]
        %v356 = vld [vmem:[%s319] sm:$0x1]
        %v358 = vperm.slane %v356, 0
        %360 = vmatpush.msra.mxu0 %v355
        %361 = vmatpush.msra.mxu0 %v354
        %362 = vmatpush.msra.mxu0 %v353
        %363 = vmatpush.msra.mxu0 %v352
        %364 = vmatpush.msra.mxu0 %v351
        %365 = vmatpush.msra.mxu0 %v350
        %366 = vmatpush.msra.mxu0 %v349
        %367 = vmatpush.msra.mxu0 %v348
        %368 = vmatpush.msra.mxu0 %v347
        %369 = vmatpush.msra.mxu0 %v346
        %370 = vmatpush.msra.mxu0 %v345
        %371 = vmatpush.msra.mxu0 %v344
        %372 = vmatpush.msra.mxu0 %v343
        %373 = vmatpush.msra.mxu0 %v342
        %374 = vmatpush.msra.mxu0 %v341
        %375 = vmatpush.msra.mxu0 %v340
        %376 = vmatmul.f32.gmra.mxu0 %v333
        %v377 = vpop.f32.mrf.mxu0
        %v378 = vadd.f32 %v358, %v377
        %379 = vmatmul.f32.gmra.mxu0 %v334
        %v380 = vpop.f32.mrf.mxu0
        %v381 = vadd.f32 %v358, %v380
        %382 = vmatmul.f32.gmra.mxu0 %v335
        %v383 = vpop.f32.mrf.mxu0
        %v384 = vadd.f32 %v358, %v383
        %385 = vmatmul.f32.gmra.mxu0 %v336
        %v386 = vpop.f32.mrf.mxu0
        %v387 = vadd.f32 %v358, %v386
        %388 = vmatmul.f32.gmra.mxu0 %v337
        %v389 = vpop.f32.mrf.mxu0
        %v390 = vadd.f32 %v358, %v389
        %391 = vmatmul.f32.gmra.mxu0 %v338
        %v392 = vpop.f32.mrf.mxu0
        %v393 = vadd.f32 %v358, %v392
        %394 = vmatmul.f32.gmra.mxu0 %v339
        %v395 = vpop.f32.mrf.mxu0
        %v396 = vadd.f32 %v358, %v395
        %397 = vdwg.mxu0
        %v398 = vmax.f32 %v378, 0.0
        %v399 = vmax.f32 %v381, 0.0
        %v400 = vmax.f32 %v384, 0.0
        %v401 = vmax.f32 %v387, 0.0
        %v402 = vmax.f32 %v390, 0.0
        %v403 = vmax.f32 %v393, 0.0
        %v404 = vmax.f32 %v396, 0.0
        %v405 = vld [vmem:[#allocation2] sm:$0xff]
        %v406 = vld [vmem:[#allocation2 + $0x8] sm:$0xff]
        %v407 = vld [vmem:[#allocation2 + $0x10] sm:$0xff]
        %v408 = vld [vmem:[#allocation2 + $0x18] sm:$0xff]
        %v409 = vld [vmem:[#allocation2 + $0x20] sm:$0xff]
        %v410 = vld [vmem:[#allocation2 + $0x28] sm:$0xff]
        %v411 = vld [vmem:[#allocation2 + $0x30] sm:$0xff]
        %v412 = vld [vmem:[#allocation8] sm:$0xff]
        %v413 = vld [vmem:[#allocation8 + $0x8] sm:$0xff]
        %v414 = vld [vmem:[#allocation8 + $0x10] sm:$0xff]
        %v415 = vld [vmem:[#allocation8 + $0x18] sm:$0xff]
        %v416 = vld [vmem:[#allocation8 + $0x20] sm:$0xff]
        %v417 = vld [vmem:[#allocation8 + $0x28] sm:$0xff]
        %v418 = vld [vmem:[#allocation8 + $0x30] sm:$0xff]
        %v419 = vld [vmem:[#allocation8 + $0x38] sm:$0xff]
        %v420 = vld [vmem:[#allocation8 + $0x40] sm:$0xff]
        %v421 = vld [vmem:[#allocation8 + $0x48] sm:$0xff]
        %v422 = vld [vmem:[#allocation8 + $0x50] sm:$0xff]
        %v423 = vld [vmem:[#allocation8 + $0x58] sm:$0xff]
        %v424 = vld [vmem:[#allocation8 + $0x60] sm:$0xff]
        %v425 = vld [vmem:[#allocation8 + $0x68] sm:$0xff]
        %v426 = vld [vmem:[#allocation8 + $0x70] sm:$0xff]
        %v427 = vld [vmem:[#allocation8 + $0x78] sm:$0xff]
        %428 = vmatpush.msra.mxu0 %v427
        %429 = vmatpush.msra.mxu0 %v426
        %430 = vmatpush.msra.mxu0 %v425
        %431 = vmatpush.msra.mxu0 %v424
        %432 = vmatpush.msra.mxu0 %v423
        %433 = vmatpush.msra.mxu0 %v422
        %434 = vmatpush.msra.mxu0 %v421
        %435 = vmatpush.msra.mxu0 %v420
        %436 = vmatpush.msra.mxu0 %v419
        %437 = vmatpush.msra.mxu0 %v418
        %438 = vmatpush.msra.mxu0 %v417
        %439 = vmatpush.msra.mxu0 %v416
        %440 = vmatpush.msra.mxu0 %v415
        %441 = vmatpush.msra.mxu0 %v414
        %442 = vmatpush.msra.mxu0 %v413
        %443 = vmatpush.msra.mxu0 %v412
        %444 = vmatmul.f32.gmra.mxu0 %v398
        %v445 = vpop.f32.mrf.mxu0
        %v446 = vadd.f32 0.0, %v445
        %447 = vmatmul.f32.gmra.mxu0 %v399
        %v448 = vpop.f32.mrf.mxu0
        %v449 = vadd.f32 0.0, %v448
        %450 = vmatmul.f32.gmra.mxu0 %v400
        %v451 = vpop.f32.mrf.mxu0
        %v452 = vadd.f32 0.0, %v451
        %453 = vmatmul.f32.gmra.mxu0 %v401
        %v454 = vpop.f32.mrf.mxu0
        %v455 = vadd.f32 0.0, %v454
        %456 = vmatmul.f32.gmra.mxu0 %v402
        %v457 = vpop.f32.mrf.mxu0
        %v458 = vadd.f32 0.0, %v457
        %459 = vmatmul.f32.gmra.mxu0 %v403
        %v460 = vpop.f32.mrf.mxu0
        %v461 = vadd.f32 0.0, %v460
        %462 = vmatmul.f32.gmra.mxu0 %v404
        %v463 = vpop.f32.mrf.mxu0
        %v464 = vadd.f32 0.0, %v463
        %465 = vdwg.mxu0
        %v466 = vadd.f32 %v405, %v446
        %v467 = vadd.f32 %v406, %v449
        %v468 = vadd.f32 %v407, %v452
        %v469 = vadd.f32 %v408, %v455
        %v470 = vadd.f32 %v409, %v458
        %v471 = vadd.f32 %v410, %v461
        %v472 = vadd.f32 %v411, %v464
        %473 = vst [vmem:[#allocation2] sm:$0xff] %v466
        %474 = vst [vmem:[#allocation2 + $0x8] sm:$0xff] %v467
        %475 = vst [vmem:[#allocation2 + $0x10] sm:$0xff] %v468
        %476 = vst [vmem:[#allocation2 + $0x18] sm:$0xff] %v469
        %477 = vst [vmem:[#allocation2 + $0x20] sm:$0xff] %v470
        %478 = vst [vmem:[#allocation2 + $0x28] sm:$0xff] %v471
        %479 = vst [vmem:[#allocation2 + $0x30] sm:$0xff] %v472
        // Predicated region
        $region57: #{tpu_custom_call.1} parent=39 // pred_check
          %p480 = pneg %p322
        $region58: #{tpu_custom_call.1} parent=39 // pred_check_branch
          %482 = sbr.rel (%p480) target = $region60
        $region59: #{tpu_custom_call.1} parent=39 // pred_region
          %v483 = vld [vmem:[#allocation2] sm:$0xff]
          %v484 = vld [vmem:[#allocation2 + $0x8] sm:$0xff]
          %v485 = vld [vmem:[#allocation2 + $0x10] sm:$0xff]
          %v486 = vld [vmem:[#allocation2 + $0x18] sm:$0xff]
          %v487 = vld [vmem:[#allocation2 + $0x20] sm:$0xff]
          %v488 = vld [vmem:[#allocation2 + $0x28] sm:$0xff]
          %v489 = vld [vmem:[#allocation2 + $0x30] sm:$0xff]
          %v490 = vld [vmem:[%s4] sm:$0x1]
          %v492 = vperm.slane %v490, 0
          %v494 = vadd.f32 %v483, %v492
          %v495 = vadd.f32 %v484, %v492
          %v496 = vadd.f32 %v485, %v492
          %v497 = vadd.f32 %v486, %v492
          %v498 = vadd.f32 %v487, %v492
          %v499 = vadd.f32 %v488, %v492
          %v500 = vadd.f32 %v489, %v492
          %v501 = vmax.f32 %v494, 0.0
          %v502 = vmax.f32 %v495, 0.0
          %v503 = vmax.f32 %v496, 0.0
          %v504 = vmax.f32 %v497, 0.0
          %v505 = vmax.f32 %v498, 0.0
          %v506 = vmax.f32 %v499, 0.0
          %v507 = vmax.f32 %v500, 0.0
          %v508 = vld [vmem:[%s275] sm:$0xff]
          %v509 = vld [vmem:[%s275 + $0x8] sm:$0xff]
          %v510 = vld [vmem:[%s275 + $0x10] sm:$0xff]
          %v511 = vld [vmem:[%s275 + $0x18] sm:$0xff]
          %v512 = vld [vmem:[%s275 + $0x20] sm:$0xff]
          %v513 = vld [vmem:[%s275 + $0x28] sm:$0xff]
          %v514 = vld [vmem:[%s275 + $0x30] sm:$0xff]
          %v515 = vadd.f32 %v508, %v501
          %v516 = vadd.f32 %v509, %v502
          %v517 = vadd.f32 %v510, %v503
          %v518 = vadd.f32 %v511, %v504
          %v519 = vadd.f32 %v512, %v505
          %v520 = vadd.f32 %v513, %v506
          %v521 = vadd.f32 %v514, %v507
          %522 = vst [vmem:[%s315] sm:$0xff] %v515
          %523 = vst [vmem:[%s315 + $0x8] sm:$0xff] %v516
          %524 = vst [vmem:[%s315 + $0x10] sm:$0xff] %v517
          %525 = vst [vmem:[%s315 + $0x18] sm:$0xff] %v518
          %526 = vst [vmem:[%s315 + $0x20] sm:$0xff] %v519
          %527 = vst [vmem:[%s315 + $0x28] sm:$0xff] %v520
          %528 = vst [vmem:[%s315 + $0x30] sm:$0xff] %v521
        $region60: #{tpu_custom_call.1} parent=39 // pred_fallthru
          _
        %s529 = sand.u32 %s168, 1
        %s530 = scalar_lea.sflag [#allocation5], %s529
        %s531 = sand.u32 %s168, 1
        %s532 = smul.addr %s531, 56
        %s533 = scalar_lea.vmem [#allocation9], %s532
        // Predicated region
        $region61: #{tpu_custom_call.1} parent=39 // pred_check
          %p534 = pneg %p178
        $region62: #{tpu_custom_call.1} parent=39 // pred_check_branch
          %536 = sbr.rel (%p534) target = $region64
        $region63: #{tpu_custom_call.1} parent=39 // pred_region
          %s537 = smul.u32 7, %s27
          %539 = vsyncadd %s530, 0
          %s540 = smul.addr %s537, 8
          %s541 = scalar_lea.hbm %s5, %s540
          %s542 = sshll.u32 %s533, 4
          %s543 = int_to_ptr.vmem [resolvable:$true] %s542
          %s544 = sshll.u32 %s541, 4
          %s545 = int_to_ptr.hbm [resolvable:$true] %s544
          %550 = dma.vmem_to_hbm [thread:$0]  %s543, 896, %s545, %s530, 128, 128, 8
        $region64: #{tpu_custom_call.1} parent=39 // pred_fallthru
          _
      $region40: #{tpu_custom_call.1} parent=5 // pred_fallthru
        _
      %p551 = scmp.le.s32.totalorder 2, %s18
      // Predicated region
      $region65: #{tpu_custom_call.1} parent=5 // pred_check
        %p552 = pneg %p551
      $region66: #{tpu_custom_call.1} parent=5 // pred_check_branch
        %554 = sbr.rel (%p552) target = $region68
      $region67: #{tpu_custom_call.1} parent=5 // pred_region
        %s555 = ssub.s32 %s18, 2
        // Predicated region
        $region69: #{tpu_custom_call.1} parent=67 // pred_check
          %p556 = pneg %p184
        $region70: #{tpu_custom_call.1} parent=67 // pred_check_branch
          %558 = sbr.rel (%p556) target = $region72
        $region71: #{tpu_custom_call.1} parent=67 // pred_region
          %s559 = sand.u32 %s169, 1
          %s560 = scalar_lea.sflag [#allocation5], %s559
          %s561 = sand.u32 %s169, 1
          %s562 = smul.addr %s561, 56
          %s563 = scalar_lea.vmem [#allocation9], %s562
          %565 = dma.done %s560, 896
        $region72: #{tpu_custom_call.1} parent=67 // pred_fallthru
          _
      $region68: #{tpu_custom_call.1} parent=5 // pred_fallthru
        _
    $region6: #{tpu_custom_call.1} parent=1 // loop_footer
      %s22 = sadd.s32 1, %s18
    $region7: #{tpu_custom_call.1} parent=1 // loop_footer_branch
      %17 = sbr.rel target = $region3
    $region8: #{tpu_custom_call.1} parent=1 // loop_exit
      _
    %566 = vsyncpa [#allocation4], 1
    %s567 = scalar_lea.sflag [#allocation4], 1
    %568 = vsyncpa %s567, 1
    %569 = vsyncpa [#allocation7], 1
    %570 = vsyncpa [#allocation5], 1
    %s571 = scalar_lea.sflag [#allocation5], 1
    %572 = vsyncpa %s571, 1

</llo_original>
